<compile_context>
chip_gen: v7x
topology: tpu7x:2x2x1
jax: 0.10.0
libtpu: 0.0.40
codegen_flags: <defaults>
</compile_context>

<pallas_src>
import functools

import jax
import jax.numpy as jnp
import numpy as np
from jax import lax
from jax.experimental import pallas as pl
from jax.experimental.pallas import tpu as pltpu


def _round_up(x, m):
    return (x + m - 1) // m * m


def _vmem_capacity_bytes():
    """Best-effort per-core VMEM capacity; conservative (v7x-safe) fallback."""
    try:
        info = pltpu.get_tpu_info()
        for attr in ("vmem_capacity_bytes", "vmem_size_bytes", "vmem_bytes"):
            v = getattr(info, attr, None)
            if v:
                return int(v)
    except Exception:
        pass
    return 64 * 1024 * 1024


def _pick_batch_tile(batch, seq_pad, hidden_pad, n_layers, cd_bytes, budget_bytes):
    """Largest batch-tile Bt that (a) divides B and (b) keeps the kernel's estimated
    VMEM footprint under budget_bytes.  Prefers an even number of grid steps (clean
    megacore split on 2-TensorCore chips) when that costs at most 2x in tile size."""
    # Per-(row, Hp-col) element bytes: double-buffered emb input (compute dtype),
    # double-buffered f32 output, f32 loop carry + new activation, two rolled f32
    # temporaries, and the (M, 3Hp) compute-dtype xcat matmul operand.
    per_elem = 2 * cd_bytes + 2 * 4 + 4 + 4 + 2 * 4 + 3 * cd_bytes
    w_resident = 2 * n_layers * (3 * hidden_pad * hidden_pad * cd_bytes + hidden_pad * 4)

    def fits(d):
        need = int(1.25 * d * seq_pad * hidden_pad * per_elem) + w_resident
        return need <= budget_bytes

    divs = [d for d in range(1, batch + 1) if batch % d == 0 and fits(d)]
    if not divs:
        return 1
    best = max(divs)
    even = [d for d in divs if (batch // d) % 2 == 0]
    if even:
        best_even = max(even)
        if best_even * seq_pad >= 1024 or 2 * best_even >= best:
            return best_even
    return best


def conv_encoder_kernel(emb_ref, w_ref, b_ref, out_ref, *,
                        seq_pad, seq_valid, n_layers, compute_dtype):
    """One batch-tile: runs ALL n_layers conv layers with weights resident in VMEM.

    emb_ref: (Bt, Sp, Hp) compute_dtype   fused word+pos embeddings
    w_ref:   (L, 3*Hp, Hp) compute_dtype  conv weights, taps stacked [t-1, t, t+1]
    b_ref:   (L, 1, Hp)    f32            biases
    out_ref: (Bt, Sp, Hp)  f32            final activation
    """
    Bt, Sp, Hp = out_ref.shape
    M = Bt * Sp

    # embedded = input_dropout(word_emb + pos_emb); dropout == identity (eval mode)
    x = emb_ref[...].astype(jnp.float32).reshape(M, Hp)

    # Boundary masks (row % Sp) keep the temporal rolls from leaking across the
    # per-sequence boundaries of the folded batch tile; loop-invariant, hoisted.
    row = lax.broadcasted_iota(jnp.int32, (M, 1), 0)
    rmod = row % seq_pad
    is_first = rmod == 0
    is_last = rmod == seq_pad - 1
    is_valid = rmod < seq_valid

    def layer(l, x):
        # Zero-padded temporal shifts of the f32 residual activation.
        x_prev = jnp.where(is_first, 0.0, pltpu.roll(x, shift=1, axis=0))
        x_next = jnp.where(is_last, 0.0, pltpu.roll(x, shift=M - 1, axis=0))
        # Conv1d(kernel_size=3, padding=1) as ONE MXU matmul with a 3*Hp contraction.
        xcat = jnp.concatenate(
            [x_prev.astype(compute_dtype), x.astype(compute_dtype),
             x_next.astype(compute_dtype)], axis=-1)                       # (M, 3*Hp)
        y = jnp.dot(xcat, w_ref[l], preferred_element_type=jnp.float32) + b_ref[l]
        x_new = jnp.tanh(y + x)                                            # residual + tanh, f32
        if seq_pad != seq_valid:   # static: only when S was padded up to a multiple of 8
            # Keep padded rows exactly zero so they never feed the next layer's x_next.
            x_new = jnp.where(is_valid, x_new, 0.0)
        return x_new

    if n_layers <= 8:              # static trip count: unroll fully (static w_ref[l] slices)
        for l in range(n_layers):
            x = layer(l, x)
    else:
        x = lax.fori_loop(0, n_layers, layer, x)

    out_ref[...] = x.reshape(out_ref.shape)


def prepare_params(params, compute_dtype=jnp.bfloat16):
    """One-time parameter prep (hoisted out of the per-call path): re-layout the Conv1d
    weights, stack the 3 taps along the contraction dim, zero-pad hidden to a multiple
    of 128 and cast the matmul operands to compute_dtype."""
    embed = params["embed"].astype(jnp.float32)          # (V, H)
    pos = params["pos_embed"].astype(jnp.float32)        # (max_len, H)
    conv_w = params["conv_w"].astype(jnp.float32)        # (L, C_out, C_in, K) PyTorch layout
    conv_b = params["conv_b"].astype(jnp.float32)        # (L, C_out)

    H = embed.shape[1]
    L, c_out, c_in, K = conv_w.shape
    assert c_out == c_in == H, "residual layer(cnn)+cnn requires num_channels == hidden_size"
    assert K == 3, "kernel implements kernel_size=3 (padding=1) only"

    Hp = _round_up(H, 128)
    dH = Hp - H

    # wk[l, k, ci, co] = conv_w[l, co, ci, k]; tap k pairs with x[t + k - 1].
    wk = jnp.transpose(conv_w, (0, 3, 2, 1))                       # (L, K, H, H)
    wk = jnp.pad(wk, ((0, 0), (0, 0), (0, dH), (0, dH)))           # (L, K, Hp, Hp)
    w_cat = wk.reshape(L, K * Hp, Hp).astype(compute_dtype)        # taps stacked: [t-1, t, t+1]

    b_pad = jnp.pad(conv_b, ((0, 0), (0, dH)))[:, None, :]         # (L, 1, Hp) f32

    return {
        "embed": jnp.pad(embed, ((0, 0), (0, dH))),                # (V, Hp) f32
        "pos_embed": jnp.pad(pos, ((0, 0), (0, dH))),              # (max_len, Hp) f32
        "w": w_cat,
        "b": b_pad,
        "hidden": H,
        "hidden_pad": Hp,
        "n_layers": L,
    }


def conv_encoder_forward(inputs, position_inp, prep, *, batch_tile=None, interpret=False):
    B, S = inputs.shape
    H, Hp, L = prep["hidden"], prep["hidden_pad"], prep["n_layers"]
    Sp = _round_up(S, 8)
    in_dtype = prep["w"].dtype

    # Embedding gathers + word/pos add stay in XLA (glue); the kernel receives ONE
    # fused (B, Sp, Hp) activation input in compute_dtype (halves input DMA for bf16).
    emb = (prep["embed"][inputs] + prep["pos_embed"][position_inp]).astype(in_dtype)
    # TODO(synk): training-mode dropout (stochastic mask) not implemented (identity).
    if Sp != S:
        emb = jnp.pad(emb, ((0, 0), (0, Sp - S), (0, 0)))

    # Generation-aware VMEM budgeting (v7x has 64 MiB/TC vs 128 MiB on v5e/v6e).
    vmem_cap = _vmem_capacity_bytes()
    vmem_limit = min(int(vmem_cap * 0.75), 100 * 1024 * 1024)
    cd_bytes = jnp.dtype(in_dtype).itemsize
    Bt = batch_tile if batch_tile is not None else _pick_batch_tile(
        B, Sp, Hp, L, cd_bytes, int(vmem_limit * 0.85))
    assert B % Bt == 0
    Kh = prep["w"].shape[1]                                            # 3 * Hp

    kernel = functools.partial(
        conv_encoder_kernel,
        seq_pad=Sp, seq_valid=S, n_layers=L, compute_dtype=in_dtype)

    out = pl.pallas_call(
        kernel,
        out_shape=jax.ShapeDtypeStruct((B, Sp, Hp), jnp.float32),
        grid=(B // Bt,),
        in_specs=[
            # fused embeddings: pipelined along the batch axis
            pl.BlockSpec((Bt, Sp, Hp), lambda b: (b, 0, 0)),
            # ALL layer weights / biases: constant block index -> fetched once, resident
            pl.BlockSpec((L, Kh, Hp), lambda b: (0, 0, 0)),
            pl.BlockSpec((L, 1, Hp), lambda b: (0, 0, 0)),
        ],
        out_specs=pl.BlockSpec((Bt, Sp, Hp), lambda b: (b, 0, 0)),
        compiler_params=pltpu.CompilerParams(
            dimension_semantics=("parallel",),
            vmem_limit_bytes=vmem_limit),
        interpret=interpret,
    )(emb, prep["w"], prep["b"])

    if Sp == S and Hp == H:
        return out                       # no padding was added -> skip the de-pad copy
    return out[:, :S, :H]


def reference_forward(inputs, position_inp, params, n_layers):
    """Pure-JAX reference mirroring the PyTorch forward (eval mode)."""
    emb = params["embed"][inputs] + params["pos_embed"][position_inp]   # (B, S, H)
    x = jnp.transpose(emb, (0, 2, 1))                                   # (B, C, S)
    for l in range(n_layers):
        y = lax.conv_general_dilated(
            x, params["conv_w"][l], window_strides=(1,), padding=[(1, 1)],
            dimension_numbers=("NCH", "OIH", "NCH"))
        y = y + params["conv_b"][l][None, :, None]
        x = jnp.tanh(y + x)
    return jnp.transpose(x, (0, 2, 1))                                  # (B, S, H)


def _run_case(key, *, B, S, H, V, L, compute_dtype, atol, rtol):
    K = 3
    k1, k2, k3, k4, k5 = jax.random.split(key, 5)
    params = {
        "embed": jax.random.normal(k1, (V, H), jnp.float32) * 0.1,
        "pos_embed": jax.random.normal(k2, (S, H), jnp.float32) * 0.1,
        "conv_w": jax.random.normal(k3, (L, H, H, K), jnp.float32) * (1.0 / (H * K) ** 0.5),
        "conv_b": jax.random.normal(k4, (L, H), jnp.float32) * 0.01,
    }
    inputs = jax.random.randint(k5, (B, S), 0, V)
    position_inp = jnp.broadcast_to(jnp.arange(S, dtype=jnp.int32), (B, S))

    prep = prepare_params(params, compute_dtype=compute_dtype)
    out = jax.block_until_ready(conv_encoder_forward(inputs, position_inp, prep))
    expected = reference_forward(inputs, position_inp, params, L)

    assert out.shape == (B, S, H)
    err = np.max(np.abs(np.asarray(out) - np.asarray(expected)))
    assert np.allclose(np.asarray(out), np.asarray(expected), atol=atol, rtol=rtol), err
    return out


if __name__ == "__main__":
    key = jax.random.PRNGKey(0)
    k_a, k_b, k_c = jax.random.split(key, 3)

    # Exactness check: f32 matmul operands, folded batch tile, lane-padded H=32->128.
    _run_case(k_a, B=4, S=8, H=32, V=16, L=2,
              compute_dtype=jnp.float32, atol=1e-5, rtol=1e-5)

    # Fast path: bf16 embeddings + matmul operands, f32 accumulation/bias/residual/tanh.
    _run_case(k_a, B=4, S=8, H=32, V=16, L=2,
              compute_dtype=jnp.bfloat16, atol=3e-2, rtol=3e-2)

    # Non-multiple-of-8 sequence length exercises the Sp padding + valid-row masking.
    _run_case(k_b, B=2, S=6, H=32, V=16, L=3,
              compute_dtype=jnp.float32, atol=1e-5, rtol=1e-5)

    # Already lane/sublane-aligned shapes exercise the no-de-pad fast return path.
    _run_case(k_c, B=2, S=8, H=128, V=16, L=2,
              compute_dtype=jnp.float32, atol=1e-5, rtol=1e-5)

    print("KERNEL_OK")
</pallas_src>

<mosaic_0001>
module attributes {stable_mosaic.version = 11 : i64} {
  func.func @conv_encoder_kernel(%arg0: i32, %arg1: memref<2x8x128xf32, #tpu.memory_space<vmem>>, %arg2: memref<2x384x128xf32, #tpu.memory_space<vmem>>, %arg3: memref<2x1x128xf32, #tpu.memory_space<vmem>>, %arg4: memref<2x8x128xf32, #tpu.memory_space<vmem>>) attributes {dimension_semantics = [#tpu.dimension_semantics<parallel>], iteration_bounds = array<i64: 2>, scalar_prefetch = 0 : i64, scratch_operands = 0 : i64, tpu.core_type = #tpu.core_type<tc>, window_params = [{transform_indices = @transform_0, window_bounds = array<i64: 2, 8, 128>}, {pipeline_mode = #tpu.pipeline_mode<synchronous>, transform_indices = @transform_1, window_bounds = array<i64: 2, 384, 128>}, {pipeline_mode = #tpu.pipeline_mode<synchronous>, transform_indices = @transform_2, window_bounds = array<i64: 2, 1, 128>}, {transform_indices = @transform_3, window_bounds = array<i64: 2, 8, 128>}]} {
    %c0 = arith.constant 0 : index
    %c0_0 = arith.constant 0 : index
    %c0_1 = arith.constant 0 : index
    %0 = vector.load %arg1[%c0, %c0_0, %c0_1] : memref<2x8x128xf32, #tpu.memory_space<vmem>>, vector<2x8x128xf32>
    %1 = vector.shape_cast %0 : vector<2x8x128xf32> to vector<16x128xf32>
    %2 = tpu.iota {dimensions = array<i32: 0>} : vector<16x1xi32>
    %c8_i32 = arith.constant 8 : i32
    %c0_i32 = arith.constant 0 : i32
    %3 = arith.cmpi eq, %c8_i32, %c0_i32 : i32
    %c1_i32 = arith.constant 1 : i32
    %4 = arith.select %3, %c1_i32, %c8_i32 : i32
    %5 = vector.broadcast %4 : i32 to vector<16x1xi32>
    %6 = arith.remsi %2, %5 : vector<16x1xi32>
    %c0_i32_2 = arith.constant 0 : i32
    %7 = vector.broadcast %c0_i32_2 : i32 to vector<16x1xi32>
    %8 = arith.cmpi ne, %6, %7 : vector<16x1xi32>
    %c0_i32_3 = arith.constant 0 : i32
    %9 = vector.broadcast %c0_i32_3 : i32 to vector<16x1xi32>
    %10 = arith.cmpi slt, %6, %9 : vector<16x1xi32>
    %c0_i32_4 = arith.constant 0 : i32
    %11 = arith.cmpi slt, %4, %c0_i32_4 : i32
    %12 = vector.broadcast %11 : i1 to vector<16x1xi1>
    %13 = vector.broadcast %12 : vector<16x1xi1> to vector<16x1xi1>
    %14 = arith.xori %10, %13 : vector<16x1xi1>
    %15 = arith.andi %14, %8 : vector<16x1xi1>
    %16 = vector.broadcast %4 : i32 to vector<16x1xi32>
    %17 = arith.addi %6, %16 : vector<16x1xi32>
    %18 = arith.select %15, %17, %6 : vector<16x1xi1>, vector<16x1xi32>
    %c0_i32_5 = arith.constant 0 : i32
    %19 = vector.broadcast %c0_i32_5 : i32 to vector<16x1xi32>
    %20 = arith.cmpi eq, %18, %19 : vector<16x1xi32>
    %c7_i32 = arith.constant 7 : i32
    %21 = vector.broadcast %c7_i32 : i32 to vector<16x1xi32>
    %22 = arith.cmpi eq, %18, %21 : vector<16x1xi32>
    %c1_i32_6 = arith.constant 1 : i32
    %23 = tpu.dynamic_rotate %1 by %c1_i32_6 dim 0 : vector<16x128xf32>, i32 -> vector<16x128xf32>
    %cst = arith.constant 0.000000e+00 : f32
    %24 = vector.shape_cast %20 : vector<16x1xi1> to vector<16x1xi1>
    %25 = vector.broadcast %24 : vector<16x1xi1> to vector<16x128xi1>
    %26 = vector.broadcast %cst : f32 to vector<16x128xf32>
    %27 = arith.select %25, %26, %23 : vector<16x128xi1>, vector<16x128xf32>
    %c15_i32 = arith.constant 15 : i32
    %28 = tpu.dynamic_rotate %1 by %c15_i32 dim 0 : vector<16x128xf32>, i32 -> vector<16x128xf32>
    %cst_7 = arith.constant 0.000000e+00 : f32
    %29 = vector.shape_cast %22 : vector<16x1xi1> to vector<16x1xi1>
    %30 = vector.broadcast %29 : vector<16x1xi1> to vector<16x128xi1>
    %31 = vector.broadcast %cst_7 : f32 to vector<16x128xf32>
    %32 = arith.select %30, %31, %28 : vector<16x128xi1>, vector<16x128xf32>
    %33 = tpu.concatenate %27, %1, %32 in 1 : vector<16x128xf32>, vector<16x128xf32>, vector<16x128xf32> -> vector<16x384xf32>
    %c0_8 = arith.constant 0 : index
    %c0_9 = arith.constant 0 : index
    %c0_10 = arith.constant 0 : index
    %34 = vector.load %arg2[%c0_8, %c0_9, %c0_10] : memref<2x384x128xf32, #tpu.memory_space<vmem>>, vector<1x384x128xf32>
    %35 = vector.shape_cast %34 : vector<1x384x128xf32> to vector<384x128xf32>
    %cst_11 = arith.constant dense<0.000000e+00> : vector<16x128xf32>
    %36 = tpu.matmul %33, %35, %cst_11 {dimension_numbers = #tpu.dot_dimension_numbers<[1], [0], [0], [1], [0, 0, 1, 1], [], []>} : vector<16x384xf32>, vector<384x128xf32>, vector<16x128xf32> -> vector<16x128xf32>
    %c0_12 = arith.constant 0 : index
    %c0_13 = arith.constant 0 : index
    %c0_14 = arith.constant 0 : index
    %37 = vector.load %arg3[%c0_12, %c0_13, %c0_14] : memref<2x1x128xf32, #tpu.memory_space<vmem>>, vector<1x1x128xf32>
    %38 = vector.shape_cast %37 : vector<1x1x128xf32> to vector<1x128xf32>
    %39 = vector.broadcast %38 : vector<1x128xf32> to vector<16x128xf32>
    %40 = arith.addf %36, %39 : vector<16x128xf32>
    %41 = arith.addf %40, %1 : vector<16x128xf32>
    %42 = math.tanh %41 : vector<16x128xf32>
    %c1_i32_15 = arith.constant 1 : i32
    %43 = tpu.dynamic_rotate %42 by %c1_i32_15 dim 0 : vector<16x128xf32>, i32 -> vector<16x128xf32>
    %cst_16 = arith.constant 0.000000e+00 : f32
    %44 = vector.shape_cast %20 : vector<16x1xi1> to vector<16x1xi1>
    %45 = vector.broadcast %44 : vector<16x1xi1> to vector<16x128xi1>
    %46 = vector.broadcast %cst_16 : f32 to vector<16x128xf32>
    %47 = arith.select %45, %46, %43 : vector<16x128xi1>, vector<16x128xf32>
    %c15_i32_17 = arith.constant 15 : i32
    %48 = tpu.dynamic_rotate %42 by %c15_i32_17 dim 0 : vector<16x128xf32>, i32 -> vector<16x128xf32>
    %cst_18 = arith.constant 0.000000e+00 : f32
    %49 = vector.shape_cast %22 : vector<16x1xi1> to vector<16x1xi1>
    %50 = vector.broadcast %49 : vector<16x1xi1> to vector<16x128xi1>
    %51 = vector.broadcast %cst_18 : f32 to vector<16x128xf32>
    %52 = arith.select %50, %51, %48 : vector<16x128xi1>, vector<16x128xf32>
    %53 = tpu.concatenate %47, %42, %52 in 1 : vector<16x128xf32>, vector<16x128xf32>, vector<16x128xf32> -> vector<16x384xf32>
    %c1 = arith.constant 1 : index
    %c0_19 = arith.constant 0 : index
    %c0_20 = arith.constant 0 : index
    %54 = vector.load %arg2[%c1, %c0_19, %c0_20] : memref<2x384x128xf32, #tpu.memory_space<vmem>>, vector<1x384x128xf32>
    %55 = vector.shape_cast %54 : vector<1x384x128xf32> to vector<384x128xf32>
    %cst_21 = arith.constant dense<0.000000e+00> : vector<16x128xf32>
    %56 = tpu.matmul %53, %55, %cst_21 {dimension_numbers = #tpu.dot_dimension_numbers<[1], [0], [0], [1], [0, 0, 1, 1], [], []>} : vector<16x384xf32>, vector<384x128xf32>, vector<16x128xf32> -> vector<16x128xf32>
    %c1_22 = arith.constant 1 : index
    %c0_23 = arith.constant 0 : index
    %c0_24 = arith.constant 0 : index
    %57 = vector.load %arg3[%c1_22, %c0_23, %c0_24] : memref<2x1x128xf32, #tpu.memory_space<vmem>>, vector<1x1x128xf32>
    %58 = vector.shape_cast %57 : vector<1x1x128xf32> to vector<1x128xf32>
    %59 = vector.broadcast %58 : vector<1x128xf32> to vector<16x128xf32>
    %60 = arith.addf %56, %59 : vector<16x128xf32>
    %61 = arith.addf %60, %42 : vector<16x128xf32>
    %62 = math.tanh %61 : vector<16x128xf32>
    %63 = vector.shape_cast %62 : vector<16x128xf32> to vector<2x8x128xf32>
    %c0_25 = arith.constant 0 : index
    %c0_26 = arith.constant 0 : index
    %c0_27 = arith.constant 0 : index
    %64 = vector.load %arg4[%c0_25, %c0_26, %c0_27] : memref<2x8x128xf32, #tpu.memory_space<vmem>>, vector<2x8x128xf32>
    tpu.vector_store %arg4[%c0_25, %c0_26, %c0_27], %63 {strides = array<i32>} : memref<2x8x128xf32, #tpu.memory_space<vmem>>, vector<2x8x128xf32>,
    return
  }
  func.func @transform_0(%arg0: i32) -> (i32, i32, i32) {
    %c0_i32 = arith.constant 0 : i32
    %c0_i32_0 = arith.constant 0 : i32
    %c0_i32_1 = arith.constant 0 : i32
    return %arg0, %c0_i32, %c0_i32_0 : i32, i32, i32
  }
  func.func @transform_1(%arg0: i32) -> (i32, i32, i32) {
    %c0_i32 = arith.constant 0 : i32
    %c0_i32_0 = arith.constant 0 : i32
    %c0_i32_1 = arith.constant 0 : i32
    %c0_i32_2 = arith.constant 0 : i32
    return %c0_i32, %c0_i32_0, %c0_i32_1 : i32, i32, i32
  }
  func.func @transform_2(%arg0: i32) -> (i32, i32, i32) {
    %c0_i32 = arith.constant 0 : i32
    %c0_i32_0 = arith.constant 0 : i32
    %c0_i32_1 = arith.constant 0 : i32
    %c0_i32_2 = arith.constant 0 : i32
    return %c0_i32, %c0_i32_0, %c0_i32_1 : i32, i32, i32
  }
  func.func @transform_3(%arg0: i32) -> (i32, i32, i32) {
    %c0_i32 = arith.constant 0 : i32
    %c0_i32_0 = arith.constant 0 : i32
    %c0_i32_1 = arith.constant 0 : i32
    return %arg0, %c0_i32, %c0_i32_0 : i32, i32, i32
  }
}

</mosaic_0001>

<llo_original>
// kernel: tpu_custom_call.1
$region0: #{tpu_custom_call.1}
  #allocation0 [shape = 'u32[]', space=smem, size = 0x4, offset = 0x4, fixed_abs, tag = 'smem constant byte address 0x4 - core index']
  #allocation1 [shape = 'u32[144,128]{1,0:T(1,128)}', space=vmem, size = 0x12000, scoped, tag = 'internal scratch']
  %s0 = inlined_call_operand.hbm [shape: f32[4,8,128], index: 0, kind: input, shape index: {}]
  %s1 = inlined_call_operand.hbm [shape: f32[2,384,128], index: 1, kind: input, shape index: {}]
  %s2 = inlined_call_operand.vmem [shape: f32[2,1,128], index: 2, kind: input, shape index: {}]
  %s3 = inlined_call_operand.hbm [shape: f32[4,8,128], index: 3, kind: output, shape index: {}]
  %s4 = sld [smem:[#allocation0]]
  $region53: #{tpu_custom_call.1} parent=0
    _
  %s6 = ssub.s32 1, %s4
  %s7 = scalar_select 0, %s6, %s4
  $region1: #{tpu_custom_call.1} parent=0
    #allocation2 [shape = 'u8[16384]{0}', space=vmem, size = 0x4000, scoped, tag = 'input window, operand 0']
    #allocation3 [shape = 's32[2]{0}', space=sflag, size = 0x8, scoped, tag = 'scoped memory for tpu_custom_call.1']
    #allocation4 [shape = 's32[2]{0}', space=sflag, size = 0x8, scoped, tag = 'scoped memory for tpu_custom_call.1']
    #allocation5 [shape = 'u8[393216]{0}', space=vmem, size = 0x60000, scoped, tag = 'input window, operand 1, single buffered']
    #allocation6 [shape = 's32[1]{0}', space=sflag, size = 0x4, scoped, tag = 'scoped memory for tpu_custom_call.1']
    #allocation7 [shape = 'u8[16384]{0}', space=vmem, size = 0x4000, scoped, tag = 'output window, operand 0']
    %8 = vsyncpa [#allocation3], 0
    %s9 = scalar_lea.sflag [#allocation3], 1
    %10 = vsyncpa %s9, 0
    %11 = vsyncpa [#allocation6], 0
    %12 = vsyncpa [#allocation4], 0
    %s13 = scalar_lea.sflag [#allocation4], 1
    %14 = vsyncpa %s13, 0
    loop: start=0, step=1, limit=4
    $region2: #{tpu_custom_call.1} parent=1 // loop_pre_header
      _
    $region3: #{tpu_custom_call.1} parent=1 // loop_header
      %s16 = sphi 0, %s20
      %p17 = scmp.ge.s32.totalorder %s16, 4
      %s26 = sphi 0, %s28
      %s29 = sphi 0, %s26
      %s30 = sphi 0, %s29
      %s46 = sphi 0, %s30
      %s50 = sphi 0, %s50
      %s52 = sphi 0, %s50
      %s53 = sphi 0, %s52
      %s67 = sphi 0, %s53
      %s71 = sphi 0, %s71
      %s73 = sphi 0, %s71
      %s74 = sphi 0, %s73
      %s88 = sphi 0, %s74
      %s94 = sphi 0, %s96
      %s97 = sphi 0, %s94
      %s98 = sphi 0, %s97
      %s114 = sphi 0, %s98
    $region4: #{tpu_custom_call.1} parent=1 // loop_header_branch
      %19 = sbr.rel (%p17) target = $region8
    $region5: #{tpu_custom_call.1} parent=1 // loop_body
      %s21 = ssub.s32 %s16, 1
      %s22 = ssub.s32 %s16, 2
      %s23 = sadd.s32 %s16, 1
      %s24 = ssub.s32 %s16, %s23
      %p25 = scmp.eq.s32.totalorder %s24, 0
      %s27 = sadd.s32 %s26, 1
      %s28 = scalar_select %p25, %s26, %s27
      %p31 = pneg %p25
      %p32 = scmp.eq.s32.totalorder %s16, 1
      %p33 = por %p31, %p32
      %p34 = scmp.ne.s32.totalorder %s26, %s29
      %p35 = scmp.eq.s32.totalorder %s16, 0
      %p36 = por %p34, %p35
      %p37 = scmp.ne.s32.totalorder %s26, %s29
      %p38 = scmp.eq.s32.totalorder %s21, 1
      %p39 = por %p37, %p38
      %p40 = scmp.ne.s32.totalorder %s29, %s30
      %p41 = scmp.eq.s32.totalorder %s21, 0
      %p42 = por %p40, %p41
      %p43 = scmp.ne.s32.totalorder %s29, %s30
      %p44 = scmp.eq.s32.totalorder %s22, 1
      %p45 = por %p43, %p44
      %p47 = scmp.ne.s32.totalorder %s30, %s46
      %p48 = scmp.eq.s32.totalorder %s22, 0
      %p49 = por %p47, %p48
      %s51 = sadd.s32 %s50, 1
      %p54 = scmp.eq.s32.totalorder %s16, 1
      %p55 = scmp.ne.s32.totalorder %s50, %s52
      %p56 = scmp.eq.s32.totalorder %s16, 0
      %p57 = por %p55, %p56
      %p58 = scmp.ne.s32.totalorder %s50, %s52
      %p59 = scmp.eq.s32.totalorder %s21, 1
      %p60 = por %p58, %p59
      %p61 = scmp.ne.s32.totalorder %s52, %s53
      %p62 = scmp.eq.s32.totalorder %s21, 0
      %p63 = por %p61, %p62
      %p64 = scmp.ne.s32.totalorder %s52, %s53
      %p65 = scmp.eq.s32.totalorder %s22, 1
      %p66 = por %p64, %p65
      %p68 = scmp.ne.s32.totalorder %s53, %s67
      %p69 = scmp.eq.s32.totalorder %s22, 0
      %p70 = por %p68, %p69
      %s72 = sadd.s32 %s71, 1
      %p75 = scmp.eq.s32.totalorder %s16, 1
      %p76 = scmp.ne.s32.totalorder %s71, %s73
      %p77 = scmp.eq.s32.totalorder %s16, 0
      %p78 = por %p76, %p77
      %p79 = scmp.ne.s32.totalorder %s71, %s73
      %p80 = scmp.eq.s32.totalorder %s21, 1
      %p81 = por %p79, %p80
      %p82 = scmp.ne.s32.totalorder %s73, %s74
      %p83 = scmp.eq.s32.totalorder %s21, 0
      %p84 = por %p82, %p83
      %p85 = scmp.ne.s32.totalorder %s73, %s74
      %p86 = scmp.eq.s32.totalorder %s22, 1
      %p87 = por %p85, %p86
      %p89 = scmp.ne.s32.totalorder %s74, %s88
      %p90 = scmp.eq.s32.totalorder %s22, 0
      %p91 = por %p89, %p90
      %s92 = ssub.s32 %s16, %s23
      %p93 = scmp.eq.s32.totalorder %s92, 0
      %s95 = sadd.s32 %s94, 1
      %s96 = scalar_select %p93, %s94, %s95
      %p99 = pneg %p93
      %p100 = scmp.eq.s32.totalorder %s16, 1
      %p101 = por %p99, %p100
      %p102 = scmp.ne.s32.totalorder %s94, %s97
      %p103 = scmp.eq.s32.totalorder %s16, 0
      %p104 = por %p102, %p103
      %p105 = scmp.ne.s32.totalorder %s94, %s97
      %p106 = scmp.eq.s32.totalorder %s21, 1
      %p107 = por %p105, %p106
      %p108 = scmp.ne.s32.totalorder %s97, %s98
      %p109 = scmp.eq.s32.totalorder %s21, 0
      %p110 = por %p108, %p109
      %p111 = scmp.ne.s32.totalorder %s97, %s98
      %p112 = scmp.eq.s32.totalorder %s22, 1
      %p113 = por %p111, %p112
      %p115 = scmp.ne.s32.totalorder %s98, %s114
      %p116 = scmp.eq.s32.totalorder %s22, 0
      %p117 = por %p115, %p116
      %p118 = scmp.le.s32.totalorder 1, %s16
      %p119 = scmp.lt.s32.totalorder %s16, 3
      %p120 = pnand %p118, %p119
      %p121 = pneg %p120
      // Predicated region
      $region9: #{tpu_custom_call.1} parent=5 // pred_check
        _
      $region10: #{tpu_custom_call.1} parent=5 // pred_check_branch
        %123 = sbr.rel (%p120) target = $region12
      $region11: #{tpu_custom_call.1} parent=5 // pred_region
        %s124 = ssub.s32 %s16, 1
        // Predicated region
        $region13: #{tpu_custom_call.1} parent=11 // pred_check
          %p125 = pneg %p63
        $region14: #{tpu_custom_call.1} parent=11 // pred_check_branch
          %127 = sbr.rel (%p125) target = $region16
        $region15: #{tpu_custom_call.1} parent=11 // pred_region
          %s129 = ssub.s32 12288, 12288
          %130 = vsyncadd [#allocation6], %s129
          %s131 = sshll.u32 [#allocation5], 4
          %s132 = int_to_ptr.vmem [resolvable:$true] %s131
          %137 = dma.hbm_to_vmem [thread:$0]  %s1, 12288, %s132, [#allocation6], 128, 128, 8
        $region16: #{tpu_custom_call.1} parent=11 // pred_fallthru
          _
        // Predicated region
        $region17: #{tpu_custom_call.1} parent=11 // pred_check
          %p138 = pneg %p84
        $region18: #{tpu_custom_call.1} parent=11 // pred_check_branch
          %140 = sbr.rel (%p138) target = $region20
        $region19: #{tpu_custom_call.1} parent=11 // pred_region
          _
        $region20: #{tpu_custom_call.1} parent=11 // pred_fallthru
          _
      $region12: #{tpu_custom_call.1} parent=5 // pred_fallthru
        _
      %p141 = scmp.lt.s32.totalorder %s16, 2
      // Predicated region
      $region21: #{tpu_custom_call.1} parent=5 // pred_check
        %p142 = pneg %p141
      $region22: #{tpu_custom_call.1} parent=5 // pred_check_branch
        %144 = sbr.rel (%p142) target = $region24
      $region23: #{tpu_custom_call.1} parent=5 // pred_region
        // Predicated region
        $region25: #{tpu_custom_call.1} parent=23 // pred_check
          %p145 = pneg %p36
        $region26: #{tpu_custom_call.1} parent=23 // pred_check_branch
          %147 = sbr.rel (%p145) target = $region28
        $region27: #{tpu_custom_call.1} parent=23 // pred_region
          %s148 = sand.u32 %s26, 1
          %s149 = scalar_lea.sflag [#allocation3], %s148
          %s150 = sand.u32 %s26, 1
          %s151 = smul.addr %s150, 16
          %s152 = scalar_lea.vmem [#allocation2], %s151
          %s153 = smul.u32 2, %s16
          %s155 = ssub.s32 256, 256
          %156 = vsyncadd %s149, %s155
          %s157 = smul.addr %s153, 128
          %s158 = scalar_lea.hbm %s0, %s157
          %s159 = sshll.u32 %s152, 4
          %s160 = int_to_ptr.vmem [resolvable:$true] %s159
          %165 = dma.hbm_to_vmem [thread:$0]  %s158, 256, %s160, %s149, 128, 128, 8
        $region28: #{tpu_custom_call.1} parent=23 // pred_fallthru
          _
      $region24: #{tpu_custom_call.1} parent=5 // pred_fallthru
        _
      %p166 = scmp.le.s32.totalorder 1, %s16
      %p167 = scmp.lt.s32.totalorder %s16, 3
      %p168 = pnand %p166, %p167
      %p169 = pneg %p168
      // Predicated region
      $region29: #{tpu_custom_call.1} parent=5 // pred_check
        _
      $region30: #{tpu_custom_call.1} parent=5 // pred_check_branch
        %171 = sbr.rel (%p168) target = $region32
      $region31: #{tpu_custom_call.1} parent=5 // pred_region
        %s172 = ssub.s32 %s16, 1
        %s173 = sand.u32 %s29, 1
        %s174 = scalar_lea.sflag [#allocation3], %s173
        %s175 = sand.u32 %s29, 1
        %s176 = smul.addr %s175, 16
        %s177 = scalar_lea.vmem [#allocation2], %s176
        // Predicated region
        $region33: #{tpu_custom_call.1} parent=31 // pred_check
          %p178 = pneg %p42
        $region34: #{tpu_custom_call.1} parent=31 // pred_check_branch
          %180 = sbr.rel (%p178) target = $region36
        $region35: #{tpu_custom_call.1} parent=31 // pred_region
          %181 = dma.done %s174, 256
        $region36: #{tpu_custom_call.1} parent=31 // pred_fallthru
          _
        // Predicated region
        $region37: #{tpu_custom_call.1} parent=31 // pred_check
          %p182 = pneg %p63
        $region38: #{tpu_custom_call.1} parent=31 // pred_check_branch
          %184 = sbr.rel (%p182) target = $region40
        $region39: #{tpu_custom_call.1} parent=31 // pred_region
          %185 = dma.done [#allocation6], 12288
        $region40: #{tpu_custom_call.1} parent=31 // pred_fallthru
          _
        %s186 = sand.u32 %s29, 1
        %s187 = scalar_lea.sflag [#allocation3], %s186
        %s188 = sand.u32 %s29, 1
        %s189 = smul.addr %s188, 16
        %s190 = scalar_lea.vmem [#allocation2], %s189
        %p191 = pneg %p42
        %p192 = pneg %p39
        %p193 = pneg %p63
        %p194 = pneg %p60
        %p195 = pneg %p84
        %p196 = pneg %p81
        %p197 = pneg %p110
        %p198 = pneg %p107
        %s199 = sand.u32 %s97, 1
        %s200 = scalar_lea.sflag [#allocation4], %s199
        %s201 = sand.u32 %s97, 1
        %s202 = smul.addr %s201, 16
        %s203 = scalar_lea.vmem [#allocation7], %s202
        %s204 = smul.u32 2, %s21
        %s205 = smul.u32 2, %s21
        %v206 = vld [vmem:[%s177] sm:$0xff]
        %v207 = vld [vmem:[%s177 + $0x8] sm:$0xff]
        %v208 = vlaneseq
        %v209 = vshrl.u32 %v208, 7
        %v210 = vadd.s32 %v209, 8
        %vm211 = vcmp.lt.s32.totalorder %v209, 0
        %v212 = vsub.s32 0, %v209
        %v213 = vsel %vm211, %v212, %v209
        %v214 = vshrl.u32 %v213, 3
        %v215 = vand.u32 %v213, 7
        %v216 = vsub.s32 0, %v215
        %v217 = vsel %vm211, %v216, %v215
        %vm218 = vcmp.lt.s32.totalorder %v210, 0
        %v219 = vsub.s32 0, %v210
        %v220 = vsel %vm218, %v219, %v210
        %v221 = vshrl.u32 %v220, 3
        %v222 = vand.u32 %v220, 7
        %v223 = vsub.s32 0, %v222
        %v224 = vsel %vm218, %v223, %v222
        %vm225 = vcmp.ne.s32.totalorder %v217, 0
        %vm226 = vcmp.ne.s32.totalorder %v224, 0
        %vm227 = vcmp.lt.s32.totalorder %v217, 0
        %vm228 = vcmp.lt.s32.totalorder %v224, 0
        %vm229 = vmand %vm227, %vm225
        %vm230 = vmand %vm228, %vm226
        %v231 = vadd.s32 %v217, 8
        %v232 = vadd.s32 %v224, 8
        %v233 = vsel %vm229, %v231, %v217
        %v234 = vsel %vm230, %v232, %v224
        %vm235 = vcmp.eq.s32.totalorder %v233, 0
        %vm236 = vcmp.eq.s32.totalorder %v234, 0
        %vm237 = vcmp.eq.s32.totalorder %v233, 7
        %vm238 = vcmp.eq.s32.totalorder %v234, 7
        %v239 = vrot.slane %v206, 7
        %v240 = vrot.slane %v207, 7
        %vm241 = vcmp.lt.s32.totalorder %v209, 1
        %v242 = vsel %vm241, %v239, %v240
        %v243 = vsel %vm241, %v240, %v239
        %v244 = vsel %vm235, 1, 0
        %v245 = vsel %vm236, 1, 0
        %vm246 = vcmp.eq.s32.totalorder %v244, 1
        %vm247 = vcmp.eq.s32.totalorder %v245, 1
        %v248 = vsel %vm246, 0.0, %v243
        %v249 = vsel %vm247, 0.0, %v242
        %v250 = vrot.slane %v206, 1
        %v251 = vrot.slane %v207, 1
        %vm252 = vcmp.lt.s32.totalorder %v209, 7
        %v253 = vsel %vm252, %v250, %v251
        %v254 = vsel %vm252, %v251, %v250
        %v255 = vsel %vm237, 1, 0
        %v256 = vsel %vm238, 1, 0
        %vm257 = vcmp.eq.s32.totalorder %v255, 1
        %vm258 = vcmp.eq.s32.totalorder %v256, 1
        %v259 = vsel %vm257, 0.0, %v253
        %v260 = vsel %vm258, 0.0, %v254
        %v261 = vld [vmem:[#allocation5] sm:$0xff]
        %v262 = vld [vmem:[#allocation5 + $0x8] sm:$0xff]
        %v263 = vld [vmem:[#allocation5 + $0x10] sm:$0xff]
        %v264 = vld [vmem:[#allocation5 + $0x18] sm:$0xff]
        %v265 = vld [vmem:[#allocation5 + $0x20] sm:$0xff]
        %v266 = vld [vmem:[#allocation5 + $0x28] sm:$0xff]
        %v267 = vld [vmem:[#allocation5 + $0x30] sm:$0xff]
        %v268 = vld [vmem:[#allocation5 + $0x38] sm:$0xff]
        %v269 = vld [vmem:[#allocation5 + $0x40] sm:$0xff]
        %v270 = vld [vmem:[#allocation5 + $0x48] sm:$0xff]
        %v271 = vld [vmem:[#allocation5 + $0x50] sm:$0xff]
        %v272 = vld [vmem:[#allocation5 + $0x58] sm:$0xff]
        %v273 = vld [vmem:[#allocation5 + $0x60] sm:$0xff]
        %v274 = vld [vmem:[#allocation5 + $0x68] sm:$0xff]
        %v275 = vld [vmem:[#allocation5 + $0x70] sm:$0xff]
        %v276 = vld [vmem:[#allocation5 + $0x78] sm:$0xff]
        %v277 = vld [vmem:[#allocation5 + $0x80] sm:$0xff]
        %v278 = vld [vmem:[#allocation5 + $0x88] sm:$0xff]
        %v279 = vld [vmem:[#allocation5 + $0x90] sm:$0xff]
        %v280 = vld [vmem:[#allocation5 + $0x98] sm:$0xff]
        %v281 = vld [vmem:[#allocation5 + $0xa0] sm:$0xff]
        %v282 = vld [vmem:[#allocation5 + $0xa8] sm:$0xff]
        %v283 = vld [vmem:[#allocation5 + $0xb0] sm:$0xff]
        %v284 = vld [vmem:[#allocation5 + $0xb8] sm:$0xff]
        %v285 = vld [vmem:[#allocation5 + $0xc0] sm:$0xff]
        %v286 = vld [vmem:[#allocation5 + $0xc8] sm:$0xff]
        %v287 = vld [vmem:[#allocation5 + $0xd0] sm:$0xff]
        %v288 = vld [vmem:[#allocation5 + $0xd8] sm:$0xff]
        %v289 = vld [vmem:[#allocation5 + $0xe0] sm:$0xff]
        %v290 = vld [vmem:[#allocation5 + $0xe8] sm:$0xff]
        %v291 = vld [vmem:[#allocation5 + $0xf0] sm:$0xff]
        %v292 = vld [vmem:[#allocation5 + $0xf8] sm:$0xff]
        %v293 = vld [vmem:[#allocation5 + $0x100] sm:$0xff]
        %v294 = vld [vmem:[#allocation5 + $0x108] sm:$0xff]
        %v295 = vld [vmem:[#allocation5 + $0x110] sm:$0xff]
        %v296 = vld [vmem:[#allocation5 + $0x118] sm:$0xff]
        %v297 = vld [vmem:[#allocation5 + $0x120] sm:$0xff]
        %v298 = vld [vmem:[#allocation5 + $0x128] sm:$0xff]
        %v299 = vld [vmem:[#allocation5 + $0x130] sm:$0xff]
        %v300 = vld [vmem:[#allocation5 + $0x138] sm:$0xff]
        %v301 = vld [vmem:[#allocation5 + $0x140] sm:$0xff]
        %v302 = vld [vmem:[#allocation5 + $0x148] sm:$0xff]
        %v303 = vld [vmem:[#allocation5 + $0x150] sm:$0xff]
        %v304 = vld [vmem:[#allocation5 + $0x158] sm:$0xff]
        %v305 = vld [vmem:[#allocation5 + $0x160] sm:$0xff]
        %v306 = vld [vmem:[#allocation5 + $0x168] sm:$0xff]
        %v307 = vld [vmem:[#allocation5 + $0x170] sm:$0xff]
        %v308 = vld [vmem:[#allocation5 + $0x178] sm:$0xff]
        %v309 = vld [vmem:[%s2] sm:$0x1]
        %v311 = vlaneseq
        %v312 = vshrl.u32 %v311, 7
        %v313 = vsub.s32 0, %v312
        %v314 = vrot.slane %v309, %v313
        %316 = vmatprep.subr.mxu0 0.0
        %317 = vmatpush1.msra.mxu0 %v261
        %318 = vmatprep.subr.mxu0 0.0
        %319 = vmatpush1.msra.mxu0 %v262
        %320 = vmatprep.subr.mxu0 0.0
        %321 = vmatpush1.msra.mxu0 %v263
        %322 = vmatprep.subr.mxu0 0.0
        %323 = vmatpush1.msra.mxu0 %v264
        %324 = vmatprep.subr.mxu0 0.0
        %325 = vmatpush1.msra.mxu0 %v265
        %326 = vmatprep.subr.mxu0 0.0
        %327 = vmatpush1.msra.mxu0 %v266
        %328 = vmatprep.subr.mxu0 0.0
        %329 = vmatpush1.msra.mxu0 %v267
        %330 = vmatprep.subr.mxu0 0.0
        %331 = vmatpush1.msra.mxu0 %v268
        %332 = vmatprep.subr.mxu0 0.0
        %333 = vmatpush1.msra.mxu0 %v269
        %334 = vmatprep.subr.mxu0 0.0
        %335 = vmatpush1.msra.mxu0 %v270
        %336 = vmatprep.subr.mxu0 0.0
        %337 = vmatpush1.msra.mxu0 %v271
        %338 = vmatprep.subr.mxu0 0.0
        %339 = vmatpush1.msra.mxu0 %v272
        %340 = vmatprep.subr.mxu0 0.0
        %341 = vmatpush1.msra.mxu0 %v273
        %342 = vmatprep.subr.mxu0 0.0
        %343 = vmatpush1.msra.mxu0 %v274
        %344 = vmatprep.subr.mxu0 0.0
        %345 = vmatpush1.msra.mxu0 %v275
        %346 = vmatprep.subr.mxu0 0.0
        %347 = vmatpush1.msra.mxu0 %v276
        %348 = vmatprep.subr.mxu0 0.0
        %349 = vmatpush1.msra.mxu0 %v277
        %350 = vmatprep.subr.mxu0 0.0
        %351 = vmatpush1.msra.mxu0 %v278
        %352 = vmatprep.subr.mxu0 0.0
        %353 = vmatpush1.msra.mxu0 %v279
        %354 = vmatprep.subr.mxu0 0.0
        %355 = vmatpush1.msra.mxu0 %v280
        %356 = vmatprep.subr.mxu0 0.0
        %357 = vmatpush1.msra.mxu0 %v281
        %358 = vmatprep.subr.mxu0 0.0
        %359 = vmatpush1.msra.mxu0 %v282
        %360 = vmatprep.subr.mxu0 0.0
        %361 = vmatpush1.msra.mxu0 %v283
        %362 = vmatprep.subr.mxu0 0.0
        %363 = vmatpush1.msra.mxu0 %v284
        %364 = vmatprep.subr.mxu0 0.0
        %365 = vmatpush1.msra.mxu0 %v285
        %366 = vmatprep.subr.mxu0 0.0
        %367 = vmatpush1.msra.mxu0 %v286
        %368 = vmatprep.subr.mxu0 0.0
        %369 = vmatpush1.msra.mxu0 %v287
        %370 = vmatprep.subr.mxu0 0.0
        %371 = vmatpush1.msra.mxu0 %v288
        %372 = vmatprep.subr.mxu0 0.0
        %373 = vmatpush1.msra.mxu0 %v289
        %374 = vmatprep.subr.mxu0 0.0
        %375 = vmatpush1.msra.mxu0 %v290
        %376 = vmatprep.subr.mxu0 0.0
        %377 = vmatpush1.msra.mxu0 %v291
        %378 = vmatprep.subr.mxu0 0.0
        %379 = vmatpush1.msra.mxu0 %v292
        %380 = vmatprep.mubr.f32.mxu0 %v206
        %381 = vmatmul.mubr.f32.gmra.mrb[0].mxu0 %v248
        %v382 = vpop.f32.mrb[0].mxu0
        %v383 = vadd.f32 %v314, %v382
        %v384 = vpop.f32.mrb[0].mxu0
        %385 = vmatprep.mubr.f32.mxu0 %v207
        %386 = vmatmul.mubr.f32.gmra.mrb[0].mxu0 %v249
        %v387 = vpop.f32.mrb[0].mxu0
        %v388 = vadd.f32 %v314, %v387
        %v389 = vpop.f32.mrb[0].mxu0
        %390 = vdwg.mxu0
        %391 = vmatprep.subr.mxu0 0.0
        %392 = vmatpush1.msra.mxu0 %v293
        %393 = vmatprep.subr.mxu0 0.0
        %394 = vmatpush1.msra.mxu0 %v294
        %395 = vmatprep.subr.mxu0 0.0
        %396 = vmatpush1.msra.mxu0 %v295
        %397 = vmatprep.subr.mxu0 0.0
        %398 = vmatpush1.msra.mxu0 %v296
        %399 = vmatprep.subr.mxu0 0.0
        %400 = vmatpush1.msra.mxu0 %v297
        %401 = vmatprep.subr.mxu0 0.0
        %402 = vmatpush1.msra.mxu0 %v298
        %403 = vmatprep.subr.mxu0 0.0
        %404 = vmatpush1.msra.mxu0 %v299
        %405 = vmatprep.subr.mxu0 0.0
        %406 = vmatpush1.msra.mxu0 %v300
        %407 = vmatprep.subr.mxu0 0.0
        %408 = vmatpush1.msra.mxu0 %v301
        %409 = vmatprep.subr.mxu0 0.0
        %410 = vmatpush1.msra.mxu0 %v302
        %411 = vmatprep.subr.mxu0 0.0
        %412 = vmatpush1.msra.mxu0 %v303
        %413 = vmatprep.subr.mxu0 0.0
        %414 = vmatpush1.msra.mxu0 %v304
        %415 = vmatprep.subr.mxu0 0.0
        %416 = vmatpush1.msra.mxu0 %v305
        %417 = vmatprep.subr.mxu0 0.0
        %418 = vmatpush1.msra.mxu0 %v306
        %419 = vmatprep.subr.mxu0 0.0
        %420 = vmatpush1.msra.mxu0 %v307
        %421 = vmatprep.subr.mxu0 0.0
        %422 = vmatpush1.msra.mxu0 %v308
        %423 = vmatprep.subr.mxu0 0.0
        %424 = vmatpush1.msra.mxu0 0.0
        %425 = vmatprep.subr.mxu0 0.0
        %426 = vmatpush1.msra.mxu0 0.0
        %427 = vmatprep.subr.mxu0 0.0
        %428 = vmatpush1.msra.mxu0 0.0
        %429 = vmatprep.subr.mxu0 0.0
        %430 = vmatpush1.msra.mxu0 0.0
        %431 = vmatprep.subr.mxu0 0.0
        %432 = vmatpush1.msra.mxu0 0.0
        %433 = vmatprep.subr.mxu0 0.0
        %434 = vmatpush1.msra.mxu0 0.0
        %435 = vmatprep.subr.mxu0 0.0
        %436 = vmatpush1.msra.mxu0 0.0
        %437 = vmatprep.subr.mxu0 0.0
        %438 = vmatpush1.msra.mxu0 0.0
        %439 = vmatprep.subr.mxu0 0.0
        %440 = vmatpush1.msra.mxu0 0.0
        %441 = vmatprep.subr.mxu0 0.0
        %442 = vmatpush1.msra.mxu0 0.0
        %443 = vmatprep.subr.mxu0 0.0
        %444 = vmatpush1.msra.mxu0 0.0
        %445 = vmatprep.subr.mxu0 0.0
        %446 = vmatpush1.msra.mxu0 0.0
        %447 = vmatprep.subr.mxu0 0.0
        %448 = vmatpush1.msra.mxu0 0.0
        %449 = vmatprep.subr.mxu0 0.0
        %450 = vmatpush1.msra.mxu0 0.0
        %451 = vmatprep.subr.mxu0 0.0
        %452 = vmatpush1.msra.mxu0 0.0
        %453 = vmatprep.subr.mxu0 0.0
        %454 = vmatpush1.msra.mxu0 0.0
        %455 = vmatprep.mubr.f32.mxu0 0.0
        %456 = vmatmul.mubr.f32.gmra.mrb[0].mxu0 %v259
        %v457 = vpop.f32.mrb[0].mxu0
        %v458 = vadd.f32 %v383, %v457
        %v459 = vpop.f32.mrb[0].mxu0
        %460 = vmatprep.mubr.f32.mxu0 0.0
        %461 = vmatmul.mubr.f32.gmra.mrb[0].mxu0 %v260
        %v462 = vpop.f32.mrb[0].mxu0
        %v463 = vadd.f32 %v388, %v462
        %v464 = vpop.f32.mrb[0].mxu0
        %465 = vdwg.mxu0
        %v466 = vadd.f32 %v458, %v206
        %v467 = vadd.f32 %v463, %v207
        %v468 = vtanh.pop %v466
        %v469 = vtanh.pop %v467
        %v470 = vrot.slane %v468, 7
        %v471 = vrot.slane %v469, 7
        %v472 = vsel %vm241, %v470, %v471
        %v473 = vsel %vm241, %v471, %v470
        %v474 = vsel %vm246, 0.0, %v473
        %v475 = vsel %vm247, 0.0, %v472
        %v476 = vrot.slane %v468, 1
        %v477 = vrot.slane %v469, 1
        %v478 = vsel %vm252, %v476, %v477
        %v479 = vsel %vm252, %v477, %v476
        %v480 = vsel %vm257, 0.0, %v478
        %v481 = vsel %vm258, 0.0, %v479
        %s482 = scalar_lea.vmem [#allocation5], 384
        %v483 = vld [vmem:[%s482] sm:$0xff]
        %v484 = vld [vmem:[%s482 + $0x8] sm:$0xff]
        %v485 = vld [vmem:[%s482 + $0x10] sm:$0xff]
        %v486 = vld [vmem:[%s482 + $0x18] sm:$0xff]
        %v487 = vld [vmem:[%s482 + $0x20] sm:$0xff]
        %v488 = vld [vmem:[%s482 + $0x28] sm:$0xff]
        %v489 = vld [vmem:[%s482 + $0x30] sm:$0xff]
        %v490 = vld [vmem:[%s482 + $0x38] sm:$0xff]
        %v491 = vld [vmem:[%s482 + $0x40] sm:$0xff]
        %v492 = vld [vmem:[%s482 + $0x48] sm:$0xff]
        %v493 = vld [vmem:[%s482 + $0x50] sm:$0xff]
        %v494 = vld [vmem:[%s482 + $0x58] sm:$0xff]
        %v495 = vld [vmem:[%s482 + $0x60] sm:$0xff]
        %v496 = vld [vmem:[%s482 + $0x68] sm:$0xff]
        %v497 = vld [vmem:[%s482 + $0x70] sm:$0xff]
        %v498 = vld [vmem:[%s482 + $0x78] sm:$0xff]
        %v499 = vld [vmem:[%s482 + $0x80] sm:$0xff]
        %v500 = vld [vmem:[%s482 + $0x88] sm:$0xff]
        %v501 = vld [vmem:[%s482 + $0x90] sm:$0xff]
        %v502 = vld [vmem:[%s482 + $0x98] sm:$0xff]
        %v503 = vld [vmem:[%s482 + $0xa0] sm:$0xff]
        %v504 = vld [vmem:[%s482 + $0xa8] sm:$0xff]
        %v505 = vld [vmem:[%s482 + $0xb0] sm:$0xff]
        %v506 = vld [vmem:[%s482 + $0xb8] sm:$0xff]
        %v507 = vld [vmem:[%s482 + $0xc0] sm:$0xff]
        %v508 = vld [vmem:[%s482 + $0xc8] sm:$0xff]
        %v509 = vld [vmem:[%s482 + $0xd0] sm:$0xff]
        %v510 = vld [vmem:[%s482 + $0xd8] sm:$0xff]
        %v511 = vld [vmem:[%s482 + $0xe0] sm:$0xff]
        %v512 = vld [vmem:[%s482 + $0xe8] sm:$0xff]
        %v513 = vld [vmem:[%s482 + $0xf0] sm:$0xff]
        %v514 = vld [vmem:[%s482 + $0xf8] sm:$0xff]
        %v515 = vld [vmem:[%s482 + $0x100] sm:$0xff]
        %v516 = vld [vmem:[%s482 + $0x108] sm:$0xff]
        %v517 = vld [vmem:[%s482 + $0x110] sm:$0xff]
        %v518 = vld [vmem:[%s482 + $0x118] sm:$0xff]
        %v519 = vld [vmem:[%s482 + $0x120] sm:$0xff]
        %v520 = vld [vmem:[%s482 + $0x128] sm:$0xff]
        %v521 = vld [vmem:[%s482 + $0x130] sm:$0xff]
        %v522 = vld [vmem:[%s482 + $0x138] sm:$0xff]
        %v523 = vld [vmem:[%s482 + $0x140] sm:$0xff]
        %v524 = vld [vmem:[%s482 + $0x148] sm:$0xff]
        %v525 = vld [vmem:[%s482 + $0x150] sm:$0xff]
        %v526 = vld [vmem:[%s482 + $0x158] sm:$0xff]
        %v527 = vld [vmem:[%s482 + $0x160] sm:$0xff]
        %v528 = vld [vmem:[%s482 + $0x168] sm:$0xff]
        %v529 = vld [vmem:[%s482 + $0x170] sm:$0xff]
        %v530 = vld [vmem:[%s482 + $0x178] sm:$0xff]
        %s531 = scalar_lea.vmem %s2, 1
        %v532 = vld [vmem:[%s531] sm:$0x1]
        %v534 = vlaneseq
        %v535 = vshrl.u32 %v534, 7
        %v536 = vsub.s32 0, %v535
        %v537 = vrot.slane %v532, %v536
        %539 = vmatprep.subr.mxu0 0.0
        %540 = vmatpush1.msra.mxu0 %v483
        %541 = vmatprep.subr.mxu0 0.0
        %542 = vmatpush1.msra.mxu0 %v484
        %543 = vmatprep.subr.mxu0 0.0
        %544 = vmatpush1.msra.mxu0 %v485
        %545 = vmatprep.subr.mxu0 0.0
        %546 = vmatpush1.msra.mxu0 %v486
        %547 = vmatprep.subr.mxu0 0.0
        %548 = vmatpush1.msra.mxu0 %v487
        %549 = vmatprep.subr.mxu0 0.0
        %550 = vmatpush1.msra.mxu0 %v488
        %551 = vmatprep.subr.mxu0 0.0
        %552 = vmatpush1.msra.mxu0 %v489
        %553 = vmatprep.subr.mxu0 0.0
        %554 = vmatpush1.msra.mxu0 %v490
        %555 = vmatprep.subr.mxu0 0.0
        %556 = vmatpush1.msra.mxu0 %v491
        %557 = vmatprep.subr.mxu0 0.0
        %558 = vmatpush1.msra.mxu0 %v492
        %559 = vmatprep.subr.mxu0 0.0
        %560 = vmatpush1.msra.mxu0 %v493
        %561 = vmatprep.subr.mxu0 0.0
        %562 = vmatpush1.msra.mxu0 %v494
        %563 = vmatprep.subr.mxu0 0.0
        %564 = vmatpush1.msra.mxu0 %v495
        %565 = vmatprep.subr.mxu0 0.0
        %566 = vmatpush1.msra.mxu0 %v496
        %567 = vmatprep.subr.mxu0 0.0
        %568 = vmatpush1.msra.mxu0 %v497
        %569 = vmatprep.subr.mxu0 0.0
        %570 = vmatpush1.msra.mxu0 %v498
        %571 = vmatprep.subr.mxu0 0.0
        %572 = vmatpush1.msra.mxu0 %v499
        %573 = vmatprep.subr.mxu0 0.0
        %574 = vmatpush1.msra.mxu0 %v500
        %575 = vmatprep.subr.mxu0 0.0
        %576 = vmatpush1.msra.mxu0 %v501
        %577 = vmatprep.subr.mxu0 0.0
        %578 = vmatpush1.msra.mxu0 %v502
        %579 = vmatprep.subr.mxu0 0.0
        %580 = vmatpush1.msra.mxu0 %v503
        %581 = vmatprep.subr.mxu0 0.0
        %582 = vmatpush1.msra.mxu0 %v504
        %583 = vmatprep.subr.mxu0 0.0
        %584 = vmatpush1.msra.mxu0 %v505
        %585 = vmatprep.subr.mxu0 0.0
        %586 = vmatpush1.msra.mxu0 %v506
        %587 = vmatprep.subr.mxu0 0.0
        %588 = vmatpush1.msra.mxu0 %v507
        %589 = vmatprep.subr.mxu0 0.0
        %590 = vmatpush1.msra.mxu0 %v508
        %591 = vmatprep.subr.mxu0 0.0
        %592 = vmatpush1.msra.mxu0 %v509
        %593 = vmatprep.subr.mxu0 0.0
        %594 = vmatpush1.msra.mxu0 %v510
        %595 = vmatprep.subr.mxu0 0.0
        %596 = vmatpush1.msra.mxu0 %v511
        %597 = vmatprep.subr.mxu0 0.0
        %598 = vmatpush1.msra.mxu0 %v512
        %599 = vmatprep.subr.mxu0 0.0
        %600 = vmatpush1.msra.mxu0 %v513
        %601 = vmatprep.subr.mxu0 0.0
        %602 = vmatpush1.msra.mxu0 %v514
        %603 = vmatprep.mubr.f32.mxu0 %v468
        %604 = vmatmul.mubr.f32.gmra.mrb[0].mxu0 %v474
        %v605 = vpop.f32.mrb[0].mxu0
        %v606 = vadd.f32 %v537, %v605
        %v607 = vpop.f32.mrb[0].mxu0
        %608 = vmatprep.mubr.f32.mxu0 %v469
        %609 = vmatmul.mubr.f32.gmra.mrb[0].mxu0 %v475
        %v610 = vpop.f32.mrb[0].mxu0
        %v611 = vadd.f32 %v537, %v610
        %v612 = vpop.f32.mrb[0].mxu0
        %613 = vdwg.mxu0
        %614 = vmatprep.subr.mxu0 0.0
        %615 = vmatpush1.msra.mxu0 %v515
        %616 = vmatprep.subr.mxu0 0.0
        %617 = vmatpush1.msra.mxu0 %v516
        %618 = vmatprep.subr.mxu0 0.0
        %619 = vmatpush1.msra.mxu0 %v517
        %620 = vmatprep.subr.mxu0 0.0
        %621 = vmatpush1.msra.mxu0 %v518
        %622 = vmatprep.subr.mxu0 0.0
        %623 = vmatpush1.msra.mxu0 %v519
        %624 = vmatprep.subr.mxu0 0.0
        %625 = vmatpush1.msra.mxu0 %v520
        %626 = vmatprep.subr.mxu0 0.0
        %627 = vmatpush1.msra.mxu0 %v521
        %628 = vmatprep.subr.mxu0 0.0
        %629 = vmatpush1.msra.mxu0 %v522
        %630 = vmatprep.subr.mxu0 0.0
        %631 = vmatpush1.msra.mxu0 %v523
        %632 = vmatprep.subr.mxu0 0.0
        %633 = vmatpush1.msra.mxu0 %v524
        %634 = vmatprep.subr.mxu0 0.0
        %635 = vmatpush1.msra.mxu0 %v525
        %636 = vmatprep.subr.mxu0 0.0
        %637 = vmatpush1.msra.mxu0 %v526
        %638 = vmatprep.subr.mxu0 0.0
        %639 = vmatpush1.msra.mxu0 %v527
        %640 = vmatprep.subr.mxu0 0.0
        %641 = vmatpush1.msra.mxu0 %v528
        %642 = vmatprep.subr.mxu0 0.0
        %643 = vmatpush1.msra.mxu0 %v529
        %644 = vmatprep.subr.mxu0 0.0
        %645 = vmatpush1.msra.mxu0 %v530
        %646 = vmatprep.subr.mxu0 0.0
        %647 = vmatpush1.msra.mxu0 0.0
        %648 = vmatprep.subr.mxu0 0.0
        %649 = vmatpush1.msra.mxu0 0.0
        %650 = vmatprep.subr.mxu0 0.0
        %651 = vmatpush1.msra.mxu0 0.0
        %652 = vmatprep.subr.mxu0 0.0
        %653 = vmatpush1.msra.mxu0 0.0
        %654 = vmatprep.subr.mxu0 0.0
        %655 = vmatpush1.msra.mxu0 0.0
        %656 = vmatprep.subr.mxu0 0.0
        %657 = vmatpush1.msra.mxu0 0.0
        %658 = vmatprep.subr.mxu0 0.0
        %659 = vmatpush1.msra.mxu0 0.0
        %660 = vmatprep.subr.mxu0 0.0
        %661 = vmatpush1.msra.mxu0 0.0
        %662 = vmatprep.subr.mxu0 0.0
        %663 = vmatpush1.msra.mxu0 0.0
        %664 = vmatprep.subr.mxu0 0.0
        %665 = vmatpush1.msra.mxu0 0.0
        %666 = vmatprep.subr.mxu0 0.0
        %667 = vmatpush1.msra.mxu0 0.0
        %668 = vmatprep.subr.mxu0 0.0
        %669 = vmatpush1.msra.mxu0 0.0
        %670 = vmatprep.subr.mxu0 0.0
        %671 = vmatpush1.msra.mxu0 0.0
        %672 = vmatprep.subr.mxu0 0.0
        %673 = vmatpush1.msra.mxu0 0.0
        %674 = vmatprep.subr.mxu0 0.0
        %675 = vmatpush1.msra.mxu0 0.0
        %676 = vmatprep.subr.mxu0 0.0
        %677 = vmatpush1.msra.mxu0 0.0
        %678 = vmatprep.mubr.f32.mxu0 0.0
        %679 = vmatmul.mubr.f32.gmra.mrb[0].mxu0 %v480
        %v680 = vpop.f32.mrb[0].mxu0
        %v681 = vadd.f32 %v606, %v680
        %v682 = vpop.f32.mrb[0].mxu0
        %683 = vmatprep.mubr.f32.mxu0 0.0
        %684 = vmatmul.mubr.f32.gmra.mrb[0].mxu0 %v481
        %v685 = vpop.f32.mrb[0].mxu0
        %v686 = vadd.f32 %v611, %v685
        %v687 = vpop.f32.mrb[0].mxu0
        %688 = vdwg.mxu0
        %v689 = vadd.f32 %v681, %v468
        %v690 = vadd.f32 %v686, %v469
        %v691 = vtanh.pop %v689
        %v692 = vtanh.pop %v690
        %693 = vst [vmem:[%s203] sm:$0xff] %v691
        %694 = vst [vmem:[%s203 + $0x8] sm:$0xff] %v692
        %s695 = sand.u32 %s97, 1
        %s696 = scalar_lea.sflag [#allocation4], %s695
        %s697 = sand.u32 %s97, 1
        %s698 = smul.addr %s697, 16
        %s699 = scalar_lea.vmem [#allocation7], %s698
        // Predicated region
        $region41: #{tpu_custom_call.1} parent=31 // pred_check
          %p700 = pneg %p107
        $region42: #{tpu_custom_call.1} parent=31 // pred_check_branch
          %702 = sbr.rel (%p700) target = $region44
        $region43: #{tpu_custom_call.1} parent=31 // pred_region
          %s703 = smul.u32 2, %s21
          %s705 = ssub.s32 256, 256
          %706 = vsyncadd %s696, %s705
          %s707 = smul.addr %s703, 128
          %s708 = scalar_lea.hbm %s3, %s707
          %s709 = sshll.u32 %s699, 4
          %s710 = int_to_ptr.vmem [resolvable:$true] %s709
          %715 = dma.vmem_to_hbm [thread:$0]  %s710, 256, %s708, %s696, 128, 128, 8
        $region44: #{tpu_custom_call.1} parent=31 // pred_fallthru
          _
      $region32: #{tpu_custom_call.1} parent=5 // pred_fallthru
        _
      %p716 = scmp.le.s32.totalorder 2, %s16
      // Predicated region
      $region45: #{tpu_custom_call.1} parent=5 // pred_check
        %p717 = pneg %p716
      $region46: #{tpu_custom_call.1} parent=5 // pred_check_branch
        %719 = sbr.rel (%p717) target = $region48
      $region47: #{tpu_custom_call.1} parent=5 // pred_region
        %s720 = ssub.s32 %s16, 2
        // Predicated region
        $region49: #{tpu_custom_call.1} parent=47 // pred_check
          %p721 = pneg %p113
        $region50: #{tpu_custom_call.1} parent=47 // pred_check_branch
          %723 = sbr.rel (%p721) target = $region52
        $region51: #{tpu_custom_call.1} parent=47 // pred_region
          %s724 = sand.u32 %s98, 1
          %s725 = scalar_lea.sflag [#allocation4], %s724
          %s726 = sand.u32 %s98, 1
          %s727 = smul.addr %s726, 16
          %s728 = scalar_lea.vmem [#allocation7], %s727
          %729 = dma.done %s725, 256
        $region52: #{tpu_custom_call.1} parent=47 // pred_fallthru
          _
      $region48: #{tpu_custom_call.1} parent=5 // pred_fallthru
        _
    $region6: #{tpu_custom_call.1} parent=1 // loop_footer
      %s20 = sadd.s32 1, %s16
    $region7: #{tpu_custom_call.1} parent=1 // loop_footer_branch
      %15 = sbr.rel target = $region3
    $region8: #{tpu_custom_call.1} parent=1 // loop_exit
      _
    %730 = vsyncpa [#allocation3], 1
    %s731 = scalar_lea.sflag [#allocation3], 1
    %732 = vsyncpa %s731, 1
    %733 = vsyncpa [#allocation6], 1
    %734 = vsyncpa [#allocation4], 1
    %s735 = scalar_lea.sflag [#allocation4], 1
    %736 = vsyncpa %s735, 1

</llo_original>
